<compile_context>
chip_gen: v6e
topology: v6e:2x2x1
jax: 0.10.0
libtpu: 0.0.40
codegen_flags: <defaults>
</compile_context>

<pallas_src>
import functools

import jax
import jax.numpy as jnp
from jax.experimental import pallas as pl
from jax.experimental.pallas import tpu as pltpu


# ---------------------------------------------------------------------------
# Per-generation sizing.
# ---------------------------------------------------------------------------
@functools.lru_cache(maxsize=1)
def _hw_params():
    vmem_cap = 64 * 1024 * 1024  # conservative default (v7x per-TC physical VMEM)
    try:
        info = pltpu.get_tpu_info()
        vmem_cap = int(getattr(info, "vmem_capacity_bytes", vmem_cap))
    except Exception:
        pass
    if vmem_cap >= 96 * 1024 * 1024:
        # v5e / v6e class: 128 MiB physical VMEM, lower HBM BW -> bigger blocks.
        return {"target_block_bytes": 7 * 1024 * 1024,
                "vmem_limit_bytes": 56 * 1024 * 1024,
                "min_grid_steps": 2}
    # v7x class: 64 MiB physical VMEM, 2 TensorCores -> >=4 steps, smaller blocks.
    return {"target_block_bytes": 4 * 1024 * 1024,
            "vmem_limit_bytes": 44 * 1024 * 1024,
            "min_grid_steps": 4}


def _cdiv(a, b):
    return -(-a // b)


def _choose_tiles(p, s1, q, itemsize, target_block_bytes, min_grid_steps):
    """Pick (ts0, ts2) for input blocks of shape (2, ts0, s1, ts2).

    Invariant: the only in-kernel reduction is over S1, which is always fully
    resident in the block.  Ragged last blocks along P or Q are therefore safe:
    padded garbage never feeds a reduction and is never written back.  Do NOT add
    reductions over P or Q without revisiting this.
    """
    # Lane-axis tile: multiple of 128, or the full extent when q <= 128.
    if q <= 128:
        ts2 = q
        lane_splittable = False
    else:
        ts2_full = (q // 128) * 128
        cap = (target_block_bytes // max(2 * s1 * itemsize, 1)) // 128 * 128
        ts2 = max(128, min(ts2_full, cap))
        lane_splittable = True
    # Leading tile under the byte budget (amortizes ~0.35us/step overhead).
    per_row_bytes = 2 * s1 * ts2 * itemsize
    ts0 = max(1, min(p, target_block_bytes // max(per_row_bytes, 1)))
    # Guarantee enough grid steps; prefer splitting the lane axis (keeps ts0 big).
    while _cdiv(p, ts0) * _cdiv(q, ts2) < min_grid_steps:
        if lane_splittable and ts2 > 128:
            ts2 = max(128, ((ts2 // 2) // 128) * 128)
        elif ts0 > 1:
            ts0 = _cdiv(ts0, 2)
        else:
            break
    return int(ts0), int(ts2)


# ---------------------------------------------------------------------------
# Kernel.
# ---------------------------------------------------------------------------
def _constraint_best_arm_kernel(cval_ref, x_ref, o_ref):
    # x_ref block: (2, TS0, S1, TS2); plane 0 = reward, plane 1 = constraint.
    # Plane slicing is on the leading axis -> no strided / cross-lane access.
    cval = cval_ref[0]
    x0 = x_ref[0].astype(jnp.float32)                      # (TS0, S1, TS2)
    x1 = x_ref[1].astype(jnp.float32)
    demeaned = x1 - jnp.mean(x1, axis=1, keepdims=True)    # mean over arms (S1)
    z = 10000.0 * (demeaned - cval)
    sig = 1.0 / (1.0 + jnp.exp(-z))                        # exact sigmoid (EUP slot)
    # folded affine: x0*sig - (1-sig) == sig*(x0+1) - 1   (ulp-level equivalent)
    o_ref[...] = (sig * (x0 + 1.0) - 1.0).astype(o_ref.dtype)


def _call_kernel(cval, x_t, p, s1, q, out_dtype, params):
    itemsize = jnp.dtype(x_t.dtype).itemsize
    ts0, ts2 = _choose_tiles(p, s1, q, itemsize,
                             params["target_block_bytes"],
                             params["min_grid_steps"])
    return pl.pallas_call(
        _constraint_best_arm_kernel,
        out_shape=jax.ShapeDtypeStruct((p, s1, q), out_dtype),
        grid=(pl.cdiv(p, ts0), pl.cdiv(q, ts2)),
        in_specs=[
            pl.BlockSpec(memory_space=pltpu.MemorySpace.SMEM),            # cval
            pl.BlockSpec((2, ts0, s1, ts2), lambda i, j: (0, i, 0, j)),   # planes
        ],
        out_specs=pl.BlockSpec((ts0, s1, ts2), lambda i, j: (i, 0, j)),
        compiler_params=pltpu.CompilerParams(
            dimension_semantics=("parallel", "parallel"),
            vmem_limit_bytes=params["vmem_limit_bytes"]),
    )(cval, x_t)


@jax.jit
def _forward(fantasy_rewards, cval):
    s0, s1, s2, _ = fantasy_rewards.shape
    params = _hw_params()
    if s2 >= 128:
        # Layout A: (2, S0, S1, S2); output is written directly as (S0, S1, S2),
        # lane axis = S2 tiled in multiples of 128.
        x_t = jnp.transpose(fantasy_rewards, (3, 0, 1, 2))
        return _call_kernel(cval, x_t, s0, s1, s2, fantasy_rewards.dtype, params)
    # Layout B (lane-dense when S2 < 128): lane axis = S0*S2.
    m = s0 * s2
    x_t = jnp.transpose(fantasy_rewards, (3, 1, 0, 2)).reshape(2, 1, s1, m)
    out_t = _call_kernel(cval, x_t, 1, s1, m, fantasy_rewards.dtype, params)
    return jnp.transpose(out_t.reshape(s1, s0, s2), (1, 0, 2))


def constraint_best_arm_forward(fantasy_rewards, constraint_vals=0.0):
    """Pallas implementation of constraint_best_arm.forward(fantasy_rewards).

    fantasy_rewards: (S0, S1, S2, 2) float array.  Returns (S0, S1, S2).
    """
    if fantasy_rewards.ndim != 4 or fantasy_rewards.shape[-1] != 2:
        raise ValueError("constraint_best_arm expects (S0, S1, S2, n_objs=2)")
    cval = jnp.asarray(constraint_vals, dtype=jnp.float32)
    if cval.size != 1:
        # TODO(synk): per-arm constraint vectors are not supported; the torch
        # module default is a scalar and the kernel takes a single SMEM scalar.
        raise ValueError("constraint_vals must be a scalar")
    return _forward(fantasy_rewards, cval.reshape((1,)))


# ---------------------------------------------------------------------------
# `true_rewards is not None` branch: host-side metric computation (plain JAX).
# ---------------------------------------------------------------------------
def constraint_best_arm_eval(fantasy_rewards, true_rewards, constraint_vals=0.0):
    """Mirrors the torch code (argmax / .item()); returns Python scalars.

    This is control/metric logic, not a kernel hot path.
    """
    fake_means = jnp.mean(fantasy_rewards, axis=0)   # (A, 2)
    true_means = jnp.mean(true_rewards, axis=0)      # (A, 2)
    fake_demeaned = fake_means[:, 1] - jnp.mean(fake_means[:, 1], keepdims=True)
    true_demeaned = true_means[:, 1] - jnp.mean(true_means[:, 1], keepdims=True)
    constraints = jnp.full_like(fake_demeaned, constraint_vals)
    feasible = (fake_demeaned > constraints).astype(fake_means.dtype)
    policy_arms = jnp.argmax(fake_means[:, 0] * feasible - 1.0 * (1.0 - feasible))
    tm0 = true_means[:, 0]
    regret = float(tm0.max() - tm0[policy_arms])
    percent_arms_correct = int(jnp.argmax(tm0) == policy_arms)
    satisfied = bool((true_demeaned > constraints)[policy_arms])
    return {"regret": regret,
            "percent_arms_correct": percent_arms_correct,
            "satisfied": satisfied}


def _reference_forward(fantasy_rewards, constraint_vals=0.0):
    x1 = fantasy_rewards[:, :, :, 1]
    demeaned = x1 - jnp.mean(x1, axis=1, keepdims=True)
    sig = jax.nn.sigmoid(10000.0 * (demeaned - constraint_vals))
    return fantasy_rewards[:, :, :, 0] * sig - 1.0 * (1.0 - sig)


if __name__ == "__main__":
    key = jax.random.PRNGKey(0)
    k1, k2, k3 = jax.random.split(key, 3)

    # Small-S2 shape (exercises the lane-dense layout B): S0=4, S1=8 arms, S2=16.
    fr_small = jax.random.normal(k1, (4, 8, 16, 2), dtype=jnp.float32)
    out_small = jax.block_until_ready(constraint_best_arm_forward(fr_small, 0.0))
    ref_small = _reference_forward(fr_small, 0.0)
    assert out_small.shape == ref_small.shape == (4, 8, 16)
    assert jnp.allclose(out_small, ref_small, atol=1e-4, rtol=1e-4)

    # Large-S2 shape (exercises the tiled layout A and the second grid axis).
    fr_big = jax.random.normal(k2, (2, 4, 256, 2), dtype=jnp.float32)
    out_big = jax.block_until_ready(constraint_best_arm_forward(fr_big, 0.1))
    ref_big = _reference_forward(fr_big, 0.1)
    assert out_big.shape == ref_big.shape == (2, 4, 256)
    assert jnp.allclose(out_big, ref_big, atol=1e-4, rtol=1e-4)

    # Exercise the `true_rewards is not None` metric branch (plain JAX).
    true_rewards = jax.random.normal(k3, (4, 8, 2), dtype=jnp.float32)
    fake_rewards = jax.random.normal(k1, (4, 8, 2), dtype=jnp.float32)
    _ = constraint_best_arm_eval(fake_rewards, true_rewards, 0.0)

    print("KERNEL_OK")
</pallas_src>

<mosaic_0001>
module attributes {stable_mosaic.version = 11 : i64} {
  func.func @_constraint_best_arm_kernel(%arg0: i32, %arg1: i32, %arg2: memref<1xf32, #tpu.memory_space<smem>>, %arg3: memref<2x1x8x64xf32, #tpu.memory_space<vmem>>, %arg4: memref<1x8x64xf32, #tpu.memory_space<vmem>>) attributes {dimension_semantics = [#tpu.dimension_semantics<parallel>, #tpu.dimension_semantics<parallel>], iteration_bounds = array<i64: 1, 1>, scalar_prefetch = 0 : i64, scratch_operands = 0 : i64, tpu.core_type = #tpu.core_type<tc>, window_params = [{transform_indices = @transform_0, window_bounds = array<i64: 1>}, {transform_indices = @transform_1, window_bounds = array<i64: 2, 1, 8, 64>}, {transform_indices = @transform_2, window_bounds = array<i64: 1, 8, 64>}]} {
    %c0 = arith.constant 0 : index
    %0 = memref.load %arg2[%c0] : memref<1xf32, #tpu.memory_space<smem>>
    %c0_0 = arith.constant 0 : index
    %c0_1 = arith.constant 0 : index
    %c0_2 = arith.constant 0 : index
    %c0_3 = arith.constant 0 : index
    %1 = vector.load %arg3[%c0_0, %c0_1, %c0_2, %c0_3] : memref<2x1x8x64xf32, #tpu.memory_space<vmem>>, vector<1x1x8x64xf32>
    %2 = vector.shape_cast %1 : vector<1x1x8x64xf32> to vector<1x8x64xf32>
    %c1 = arith.constant 1 : index
    %c0_4 = arith.constant 0 : index
    %c0_5 = arith.constant 0 : index
    %c0_6 = arith.constant 0 : index
    %3 = vector.load %arg3[%c1, %c0_4, %c0_5, %c0_6] : memref<2x1x8x64xf32, #tpu.memory_space<vmem>>, vector<1x1x8x64xf32>
    %4 = vector.shape_cast %3 : vector<1x1x8x64xf32> to vector<1x8x64xf32>
    %cst = arith.constant dense<0.000000e+00> : vector<1x64xf32>
    %5 = vector.multi_reduction <add>, %4, %cst [1] : vector<1x8x64xf32> to vector<1x64xf32>
    %6 = vector.shape_cast %5 : vector<1x64xf32> to vector<1x1x64xf32>
    %cst_7 = arith.constant 8.000000e+00 : f32
    %7 = vector.broadcast %cst_7 : f32 to vector<1x1x64xf32>
    %8 = arith.divf %6, %7 : vector<1x1x64xf32>
    %9 = vector.broadcast %8 : vector<1x1x64xf32> to vector<1x8x64xf32>
    %10 = arith.subf %4, %9 : vector<1x8x64xf32>
    %11 = vector.broadcast %0 : f32 to vector<1x8x64xf32>
    %12 = arith.subf %10, %11 : vector<1x8x64xf32>
    %cst_8 = arith.constant 1.000000e+04 : f32
    %13 = vector.broadcast %cst_8 : f32 to vector<1x8x64xf32>
    %14 = arith.mulf %13, %12 : vector<1x8x64xf32>
    %cst_9 = arith.constant 0.000000e+00 : f32
    %15 = vector.broadcast %cst_9 : f32 to vector<1x8x64xf32>
    %16 = arith.subf %15, %14 : vector<1x8x64xf32>
    %17 = math.exp %16 : vector<1x8x64xf32>
    %cst_10 = arith.constant 1.000000e+00 : f32
    %18 = vector.broadcast %cst_10 : f32 to vector<1x8x64xf32>
    %19 = arith.addf %18, %17 : vector<1x8x64xf32>
    %cst_11 = arith.constant 1.000000e+00 : f32
    %20 = vector.broadcast %cst_11 : f32 to vector<1x8x64xf32>
    %21 = arith.divf %20, %19 : vector<1x8x64xf32>
    %cst_12 = arith.constant 1.000000e+00 : f32
    %22 = vector.broadcast %cst_12 : f32 to vector<1x8x64xf32>
    %23 = arith.addf %2, %22 : vector<1x8x64xf32>
    %24 = arith.mulf %21, %23 : vector<1x8x64xf32>
    %cst_13 = arith.constant 1.000000e+00 : f32
    %25 = vector.broadcast %cst_13 : f32 to vector<1x8x64xf32>
    %26 = arith.subf %24, %25 : vector<1x8x64xf32>
    %c0_14 = arith.constant 0 : index
    %c0_15 = arith.constant 0 : index
    %c0_16 = arith.constant 0 : index
    %27 = vector.load %arg4[%c0_14, %c0_15, %c0_16] : memref<1x8x64xf32, #tpu.memory_space<vmem>>, vector<1x8x64xf32>
    tpu.vector_store %arg4[%c0_14, %c0_15, %c0_16], %26 {strides = array<i32>} : memref<1x8x64xf32, #tpu.memory_space<vmem>>, vector<1x8x64xf32>,
    return
  }
  func.func @transform_0(%arg0: i32, %arg1: i32) -> i32 {
    %c0_i32 = arith.constant 0 : i32
    %c0_i32_0 = arith.constant 0 : i32
    return %c0_i32 : i32
  }
  func.func @transform_1(%arg0: i32, %arg1: i32) -> (i32, i32, i32, i32) {
    %c0_i32 = arith.constant 0 : i32
    %c0_i32_0 = arith.constant 0 : i32
    %c0_i32_1 = arith.constant 0 : i32
    return %c0_i32, %arg0, %c0_i32_0, %arg1 : i32, i32, i32, i32
  }
  func.func @transform_2(%arg0: i32, %arg1: i32) -> (i32, i32, i32) {
    %c0_i32 = arith.constant 0 : i32
    %c0_i32_0 = arith.constant 0 : i32
    return %arg0, %c0_i32, %arg1 : i32, i32, i32
  }
}

</mosaic_0001>

<llo_original>
// kernel: _forward.1
$region0: #{_forward.1}
  #allocation0 [shape = 'u32[]', space=smem, size = 0x4, offset = 0x4, fixed_abs, tag = 'smem constant byte address 0x4 - core index']
  #allocation1 [shape = 'u32[144,128]{1,0:T(1,128)}', space=vmem, size = 0x12000, scoped, tag = 'internal scratch']
  #allocation2 [shape = 'f32[1]{0:T(128)S(6)}', space=smem, size = 0x200, scoped, tag = 'scoped memory for _forward.1']
  %s0 = inlined_call_operand.<no memory space> [shape: f32[1], index: 0, kind: input, shape index: {}]
  %s1 = inlined_call_operand.vmem [shape: f32[2,1,8,64], index: 1, kind: input, shape index: {}]
  %s2 = inlined_call_operand.vmem [shape: f32[1,8,64], index: 2, kind: output, shape index: {}]
  %s3 = sld [smem:[#allocation0]]
  $region18: #{_forward.1} parent=0
    _
  %s5 = ssub.s32 1, %s3
  %s6 = scalar_select 0, %s5, %s3
  %7 = sst [smem:[#allocation2]] %s0
  // Predicated region
  $region2: #{_forward.1} parent=0 // pred_check
    _
  $region3: #{_forward.1} parent=0 // pred_check_branch
    %9 = sbr.rel (0) target = $region5
  $region4: #{_forward.1} parent=0 // pred_region
    _
  $region5: #{_forward.1} parent=0 // pred_fallthru
    _
  // Predicated region
  $region6: #{_forward.1} parent=0 // pred_check
    _
  $region7: #{_forward.1} parent=0 // pred_check_branch
    %11 = sbr.rel (0) target = $region9
  $region8: #{_forward.1} parent=0 // pred_region
    _
  $region9: #{_forward.1} parent=0 // pred_fallthru
    _
  %s12 = sld [smem:[#allocation2]]
  %v13 = vld [vmem:[%s1] sm:$0xff]
  %s14 = scalar_lea.vmem %s1, 8
  %v15 = vld [vmem:[%s14] sm:$0xff]
  %vm16 = vcmask 523264
  %v17 = vsel %vm16, %v15, 0.0
  %v18 = vrot.slane %v17, 4
  %v19 = vadd.f32 %v17, %v18
  %v20 = vrot.slane %v19, 2
  %v21 = vadd.f32 %v19, %v20
  %v22 = vrot.slane %v21, 1
  %v23 = vadd.f32 %v21, %v22
  %v24 = vrcp.pop 8.0
  %v25 = vmul.f32 %v23, %v24
  %v26 = vsub.f32 %v15, %v25
  %v27 = vstv %s12
  %v28 = vsub.f32 %v26, %v27
  %v29 = vmul.f32 %v28, 10000.0
  %v30 = vsub.f32 0.0, %v29
  %v31 = vmul.f32 %v30, 1.442695
  %v32 = vpow.pop %v31
  %v33 = vadd.f32 %v32, 1.0
  %v34 = vrcp.pop %v33
  %v35 = vmul.f32 1.0, %v34
  %v36 = vadd.f32 %v13, 1.0
  %v37 = vmul.f32 %v35, %v36
  %v38 = vsub.f32 %v37, 1.0
  %39 = vst.msk [vmem:[%s2] sm:$0xff] %vm16, %v38
  // Predicated region
  $region10: #{_forward.1} parent=0 // pred_check
    _
  $region11: #{_forward.1} parent=0 // pred_check_branch
    %41 = sbr.rel (0) target = $region13
  $region12: #{_forward.1} parent=0 // pred_region
    _
  $region13: #{_forward.1} parent=0 // pred_fallthru
    _
  // Predicated region
  $region14: #{_forward.1} parent=0 // pred_check
    _
  $region15: #{_forward.1} parent=0 // pred_check_branch
    %43 = sbr.rel (0) target = $region17
  $region16: #{_forward.1} parent=0 // pred_region
    _
  $region17: #{_forward.1} parent=0 // pred_fallthru
    _

</llo_original>
